<compile_context>
chip_gen: v6e
topology: v6e:2x2x1
jax: 0.10.0
libtpu: 0.0.40
codegen_flags: <defaults>
</compile_context>

<pallas_src>
import jax
import jax.numpy as jnp
from jax.experimental import pallas as pl
from jax.experimental.pallas import tpu as pltpu

NUMBER_OF_CLASSES = 11
BN_EPS = 1e-5
LANE = 128          # lane width: pad the logits dim to a full lane
B_ALIGN = 16        # batch (sublane) alignment for bf16-packed activations
MAX_TILE_B = 1024   # batch tile (multiple of B_ALIGN); weights stay resident across tiles


def _round_up(n, m):
    return ((n + m - 1) // m) * m


def mlp_kernel(x_ref,
               w1_ref, b1_ref,
               w2_ref, b2_ref,
               w3_ref, b3_ref,
               w4_ref, b4_ref,
               o_ref):
    # x arrives as bf16 (cast once in the wrapper); weights are bf16; the bias
    # add / relu run in f32 on the VPU; intermediate activations are cast to
    # bf16 only when feeding the MXU, with f32 accumulation.
    h = jnp.dot(x_ref[...], w1_ref[...],
                preferred_element_type=jnp.float32) + b1_ref[...]
    h = jnp.maximum(h, 0.0)

    # dropout: eval-mode -> identity
    # TODO(synk): training-mode dropout (pltpu.prng_seed + prng_random_bits mask) not emitted.

    h = jnp.dot(h.astype(jnp.bfloat16), w2_ref[...],
                preferred_element_type=jnp.float32) + b2_ref[...]
    h = jnp.maximum(h, 0.0)

    h = jnp.dot(h.astype(jnp.bfloat16), w3_ref[...],
                preferred_element_type=jnp.float32) + b3_ref[...]
    h = jnp.maximum(h, 0.0)

    # BatchNorm1d (eval) has been folded into w4/b4 offline.
    o_ref[...] = (jnp.dot(h.astype(jnp.bfloat16), w4_ref[...],
                          preferred_element_type=jnp.float32)
                  + b4_ref[...]).astype(o_ref.dtype)


def prepare_kernel_params(params):
    """One-time offline transform of the PyTorch-style parameters:
       * fold eval-mode BatchNorm into linear4,
       * zero-pad the logits dim to 128 lanes (lane-dense output store),
       * cast weight matrices to bf16 (biases stay f32)."""
    (w1, b1, w2, b2, w3, b3, gamma, beta, mean, var, w4, b4) = params
    n_in = w1.shape[0]
    n_classes = w4.shape[1]

    # BN(eval) fold:  hn = (h - mean) * s + beta   with  s = gamma * rsqrt(var + eps)
    #   hn @ W4 + b4 = h @ (s[:,None] * W4) + ((beta - mean*s) @ W4 + b4)
    s = (gamma * jax.lax.rsqrt(var + BN_EPS)).reshape(-1)        # (hidden,)
    shift = beta.reshape(-1) - mean.reshape(-1) * s              # (hidden,)
    w4_f = w4 * s[:, None]
    b4_f = b4 + shift @ w4                # FIX: shift multiplies the ORIGINAL W4

    # Lane padding of the logits dim (padded columns are sliced off in the wrapper).
    out_pad = _round_up(n_classes, LANE)
    w4_p = jnp.pad(w4_f, ((0, 0), (0, out_pad - n_classes)))
    b4_p = jnp.pad(b4_f, ((0, 0), (0, out_pad - n_classes)))

    return dict(
        w1=w1.astype(jnp.bfloat16), b1=b1,
        w2=w2.astype(jnp.bfloat16), b2=b2,
        w3=w3.astype(jnp.bfloat16), b3=b3,
        w4=w4_p.astype(jnp.bfloat16), b4=b4_p,
        n_in=n_in, n_classes=n_classes, out_pad=out_pad,
    )


def mlp_forward(x, kp):
    batch = x.shape[0]
    n_in, out_pad = kp["n_in"], kp["out_pad"]
    hidden = kp["w1"].shape[1]

    # Batch tiling: align to B_ALIGN (bf16 sublane packing) and prefer >= 2 grid
    # steps whenever the batch allows it, so the batch axis can shard across
    # v7x's two TensorCores (harmless on v5e/v6e).
    batch_r = _round_up(batch, B_ALIGN)
    n_tiles = max(1, pl.cdiv(batch_r, MAX_TILE_B))
    if n_tiles == 1 and batch_r > B_ALIGN:
        n_tiles = 2
    tile_b = _round_up(pl.cdiv(batch_r, n_tiles), B_ALIGN)
    batch_p = _round_up(batch_r, tile_b)
    grid = (batch_p // tile_b,)

    # No feature padding: last block dim equals the full array dim (legal
    # BlockSpec), and the first matmul just runs K = n_in.  bf16 input halves
    # the activation HBM stream.
    x_p = jnp.pad(x.astype(jnp.bfloat16), ((0, batch_p - batch), (0, 0)))

    weights = (kp["w1"], kp["b1"], kp["w2"], kp["b2"],
               kp["w3"], kp["b3"], kp["w4"], kp["b4"])

    # Weights/biases: constant index_map -> block index never changes, so the
    # tiles stay resident in VMEM across batch-grid steps (DMA skipped on
    # consecutive steps).
    def resident(a):
        return pl.BlockSpec(a.shape, lambda i: (0,) * a.ndim)

    flops = 2 * batch_p * hidden * (n_in + 2 * hidden + out_pad)
    bytes_accessed = (sum(int(a.size) * a.dtype.itemsize for a in weights)
                      + int(x_p.size) * x_p.dtype.itemsize
                      + batch_p * out_pad * 4)

    out = pl.pallas_call(
        mlp_kernel,
        out_shape=jax.ShapeDtypeStruct((batch_p, out_pad), jnp.float32),
        grid=grid,
        in_specs=[pl.BlockSpec((tile_b, n_in), lambda i: (i, 0))]
                 + [resident(a) for a in weights],
        out_specs=pl.BlockSpec((tile_b, out_pad), lambda i: (i, 0)),
        compiler_params=pltpu.CompilerParams(
            dimension_semantics=("parallel",)),
        cost_estimate=pl.CostEstimate(
            flops=flops, transcendentals=0, bytes_accessed=bytes_accessed),
    )(x_p, *weights)

    return out[:batch, :kp["n_classes"]]


def init_params(key, number_of_inputs, number_of_classes, hidden):
    ks = jax.random.split(key, 12)

    def linear(kw, kb, fan_in, fan_out):
        bound = 1.0 / jnp.sqrt(fan_in)
        w = jax.random.uniform(kw, (fan_in, fan_out), jnp.float32, -bound, bound)
        b = jax.random.uniform(kb, (1, fan_out), jnp.float32, -bound, bound)
        return w, b

    w1, b1 = linear(ks[0], ks[1], number_of_inputs, hidden)
    w2, b2 = linear(ks[2], ks[3], hidden, hidden)
    w3, b3 = linear(ks[4], ks[5], hidden, hidden)
    w4, b4 = linear(ks[6], ks[7], hidden, number_of_classes)

    # BatchNorm1d params/stats, perturbed so the normalization (and its fold) is non-trivial.
    gamma = 1.0 + 0.1 * jax.random.normal(ks[8], (1, hidden), jnp.float32)
    beta = 0.1 * jax.random.normal(ks[9], (1, hidden), jnp.float32)
    mean = 0.05 * jax.random.normal(ks[10], (1, hidden), jnp.float32)
    var = 1.0 + 0.2 * jax.random.uniform(ks[11], (1, hidden), jnp.float32)

    return (w1, b1, w2, b2, w3, b3, gamma, beta, mean, var, w4, b4)


def reference_forward_f32(x, params):
    """Original (full-f32) module semantics."""
    (w1, b1, w2, b2, w3, b3, gamma, beta, mean, var, w4, b4) = params
    hp = jax.lax.Precision.HIGHEST
    h1 = jnp.maximum(jnp.dot(x, w1, precision=hp) + b1, 0.0)
    h2 = jnp.maximum(jnp.dot(h1, w2, precision=hp) + b2, 0.0)
    h3 = jnp.maximum(jnp.dot(h2, w3, precision=hp) + b3, 0.0)
    hn = (h3 - mean) * jax.lax.rsqrt(var + BN_EPS) * gamma + beta
    return jnp.dot(hn, w4, precision=hp) + b4


def reference_forward_bf16(x, kp):
    """Same arithmetic path as the kernel (bf16 MXU inputs, f32 accumulation)."""
    def mm(h, w):
        return jnp.dot(h, w, preferred_element_type=jnp.float32)
    h = jnp.maximum(mm(x.astype(jnp.bfloat16), kp["w1"]) + kp["b1"], 0.0)
    h = jnp.maximum(mm(h.astype(jnp.bfloat16), kp["w2"]) + kp["b2"], 0.0)
    h = jnp.maximum(mm(h.astype(jnp.bfloat16), kp["w3"]) + kp["b3"], 0.0)
    return (mm(h.astype(jnp.bfloat16), kp["w4"]) + kp["b4"])[:, :kp["n_classes"]]


if __name__ == "__main__":
    number_of_inputs = 32
    hidden = 128
    batch = 8

    key = jax.random.PRNGKey(0)
    k_params, k_x = jax.random.split(key)
    params = init_params(k_params, number_of_inputs, NUMBER_OF_CLASSES, hidden)
    x = jax.random.normal(k_x, (batch, number_of_inputs), jnp.float32)

    kp = prepare_kernel_params(params)

    out = mlp_forward(x, kp)
    out = jax.block_until_ready(out)
    assert out.shape == (batch, NUMBER_OF_CLASSES)

    # Tight check against a reference using the identical bf16-weight MXU path.
    ref_bf16 = reference_forward_bf16(x, kp)
    assert jnp.allclose(out, ref_bf16, atol=1e-3, rtol=1e-3), \
        float(jnp.max(jnp.abs(out - ref_bf16)))

    # Loose check against the original full-f32 module semantics
    # (differences: bf16 input/weight quantization; BN fold is now exact math).
    ref_f32 = reference_forward_f32(x, params)
    assert jnp.allclose(out, ref_f32, atol=5e-2, rtol=5e-2), \
        float(jnp.max(jnp.abs(out - ref_f32)))

    print("KERNEL_OK")
</pallas_src>

<mosaic_0001>
module attributes {stable_mosaic.version = 11 : i64} {
  func.func @mlp_kernel(%arg0: i32, %arg1: memref<16x32xbf16, #tpu.memory_space<vmem>>, %arg2: memref<32x128xbf16, #tpu.memory_space<vmem>>, %arg3: memref<1x128xf32, #tpu.memory_space<vmem>>, %arg4: memref<128x128xbf16, #tpu.memory_space<vmem>>, %arg5: memref<1x128xf32, #tpu.memory_space<vmem>>, %arg6: memref<128x128xbf16, #tpu.memory_space<vmem>>, %arg7: memref<1x128xf32, #tpu.memory_space<vmem>>, %arg8: memref<128x128xbf16, #tpu.memory_space<vmem>>, %arg9: memref<1x128xf32, #tpu.memory_space<vmem>>, %arg10: memref<16x128xf32, #tpu.memory_space<vmem>>) attributes {dimension_semantics = [#tpu.dimension_semantics<parallel>], iteration_bounds = array<i64: 1>, scalar_prefetch = 0 : i64, scratch_operands = 0 : i64, tpu.core_type = #tpu.core_type<tc>, window_params = [{transform_indices = @transform_0, window_bounds = array<i64: 16, 32>}, {pipeline_mode = #tpu.pipeline_mode<synchronous>, transform_indices = @transform_1, window_bounds = array<i64: 32, 128>}, {pipeline_mode = #tpu.pipeline_mode<synchronous>, transform_indices = @transform_2, window_bounds = array<i64: 1, 128>}, {pipeline_mode = #tpu.pipeline_mode<synchronous>, transform_indices = @transform_3, window_bounds = array<i64: 128, 128>}, {pipeline_mode = #tpu.pipeline_mode<synchronous>, transform_indices = @transform_4, window_bounds = array<i64: 1, 128>}, {pipeline_mode = #tpu.pipeline_mode<synchronous>, transform_indices = @transform_5, window_bounds = array<i64: 128, 128>}, {pipeline_mode = #tpu.pipeline_mode<synchronous>, transform_indices = @transform_6, window_bounds = array<i64: 1, 128>}, {pipeline_mode = #tpu.pipeline_mode<synchronous>, transform_indices = @transform_7, window_bounds = array<i64: 128, 128>}, {pipeline_mode = #tpu.pipeline_mode<synchronous>, transform_indices = @transform_8, window_bounds = array<i64: 1, 128>}, {transform_indices = @transform_9, window_bounds = array<i64: 16, 128>}]} {
    %c0 = arith.constant 0 : index
    %c0_0 = arith.constant 0 : index
    %0 = vector.load %arg1[%c0, %c0_0] : memref<16x32xbf16, #tpu.memory_space<vmem>>, vector<16x32xbf16>
    %c0_1 = arith.constant 0 : index
    %c0_2 = arith.constant 0 : index
    %1 = vector.load %arg2[%c0_1, %c0_2] : memref<32x128xbf16, #tpu.memory_space<vmem>>, vector<32x128xbf16>
    %cst = arith.constant dense<0.000000e+00> : vector<16x128xf32>
    %2 = tpu.matmul %0, %1, %cst {dimension_numbers = #tpu.dot_dimension_numbers<[1], [0], [0], [1], [0, 0, 1, 1], [], []>} : vector<16x32xbf16>, vector<32x128xbf16>, vector<16x128xf32> -> vector<16x128xf32>
    %c0_3 = arith.constant 0 : index
    %c0_4 = arith.constant 0 : index
    %3 = vector.load %arg3[%c0_3, %c0_4] : memref<1x128xf32, #tpu.memory_space<vmem>>, vector<1x128xf32>
    %4 = vector.broadcast %3 : vector<1x128xf32> to vector<16x128xf32>
    %5 = arith.addf %2, %4 : vector<16x128xf32>
    %cst_5 = arith.constant 0.000000e+00 : f32
    %6 = vector.broadcast %cst_5 : f32 to vector<16x128xf32>
    %7 = arith.maximumf %5, %6 : vector<16x128xf32>
    %8 = arith.truncf %7 : vector<16x128xf32> to vector<16x128xbf16>
    %c0_6 = arith.constant 0 : index
    %c0_7 = arith.constant 0 : index
    %9 = vector.load %arg4[%c0_6, %c0_7] : memref<128x128xbf16, #tpu.memory_space<vmem>>, vector<128x128xbf16>
    %cst_8 = arith.constant dense<0.000000e+00> : vector<16x128xf32>
    %10 = tpu.matmul %8, %9, %cst_8 {dimension_numbers = #tpu.dot_dimension_numbers<[1], [0], [0], [1], [0, 0, 1, 1], [], []>} : vector<16x128xbf16>, vector<128x128xbf16>, vector<16x128xf32> -> vector<16x128xf32>
    %c0_9 = arith.constant 0 : index
    %c0_10 = arith.constant 0 : index
    %11 = vector.load %arg5[%c0_9, %c0_10] : memref<1x128xf32, #tpu.memory_space<vmem>>, vector<1x128xf32>
    %12 = vector.broadcast %11 : vector<1x128xf32> to vector<16x128xf32>
    %13 = arith.addf %10, %12 : vector<16x128xf32>
    %cst_11 = arith.constant 0.000000e+00 : f32
    %14 = vector.broadcast %cst_11 : f32 to vector<16x128xf32>
    %15 = arith.maximumf %13, %14 : vector<16x128xf32>
    %16 = arith.truncf %15 : vector<16x128xf32> to vector<16x128xbf16>
    %c0_12 = arith.constant 0 : index
    %c0_13 = arith.constant 0 : index
    %17 = vector.load %arg6[%c0_12, %c0_13] : memref<128x128xbf16, #tpu.memory_space<vmem>>, vector<128x128xbf16>
    %cst_14 = arith.constant dense<0.000000e+00> : vector<16x128xf32>
    %18 = tpu.matmul %16, %17, %cst_14 {dimension_numbers = #tpu.dot_dimension_numbers<[1], [0], [0], [1], [0, 0, 1, 1], [], []>} : vector<16x128xbf16>, vector<128x128xbf16>, vector<16x128xf32> -> vector<16x128xf32>
    %c0_15 = arith.constant 0 : index
    %c0_16 = arith.constant 0 : index
    %19 = vector.load %arg7[%c0_15, %c0_16] : memref<1x128xf32, #tpu.memory_space<vmem>>, vector<1x128xf32>
    %20 = vector.broadcast %19 : vector<1x128xf32> to vector<16x128xf32>
    %21 = arith.addf %18, %20 : vector<16x128xf32>
    %cst_17 = arith.constant 0.000000e+00 : f32
    %22 = vector.broadcast %cst_17 : f32 to vector<16x128xf32>
    %23 = arith.maximumf %21, %22 : vector<16x128xf32>
    %24 = arith.truncf %23 : vector<16x128xf32> to vector<16x128xbf16>
    %c0_18 = arith.constant 0 : index
    %c0_19 = arith.constant 0 : index
    %25 = vector.load %arg8[%c0_18, %c0_19] : memref<128x128xbf16, #tpu.memory_space<vmem>>, vector<128x128xbf16>
    %cst_20 = arith.constant dense<0.000000e+00> : vector<16x128xf32>
    %26 = tpu.matmul %24, %25, %cst_20 {dimension_numbers = #tpu.dot_dimension_numbers<[1], [0], [0], [1], [0, 0, 1, 1], [], []>} : vector<16x128xbf16>, vector<128x128xbf16>, vector<16x128xf32> -> vector<16x128xf32>
    %c0_21 = arith.constant 0 : index
    %c0_22 = arith.constant 0 : index
    %27 = vector.load %arg9[%c0_21, %c0_22] : memref<1x128xf32, #tpu.memory_space<vmem>>, vector<1x128xf32>
    %28 = vector.broadcast %27 : vector<1x128xf32> to vector<16x128xf32>
    %29 = arith.addf %26, %28 : vector<16x128xf32>
    %c0_23 = arith.constant 0 : index
    %c0_24 = arith.constant 0 : index
    %30 = vector.load %arg10[%c0_23, %c0_24] : memref<16x128xf32, #tpu.memory_space<vmem>>, vector<16x128xf32>
    tpu.vector_store %arg10[%c0_23, %c0_24], %29 {strides = array<i32>} : memref<16x128xf32, #tpu.memory_space<vmem>>, vector<16x128xf32>,
    return
  }
  func.func @transform_0(%arg0: i32) -> (i32, i32) {
    %c0_i32 = arith.constant 0 : i32
    %c0_i32_0 = arith.constant 0 : i32
    return %arg0, %c0_i32 : i32, i32
  }
  func.func @transform_1(%arg0: i32) -> (i32, i32) {
    %c0_i32 = arith.constant 0 : i32
    %c0_i32_0 = arith.constant 0 : i32
    %c0_i32_1 = arith.constant 0 : i32
    return %c0_i32, %c0_i32_0 : i32, i32
  }
  func.func @transform_2(%arg0: i32) -> (i32, i32) {
    %c0_i32 = arith.constant 0 : i32
    %c0_i32_0 = arith.constant 0 : i32
    %c0_i32_1 = arith.constant 0 : i32
    return %c0_i32, %c0_i32_0 : i32, i32
  }
  func.func @transform_3(%arg0: i32) -> (i32, i32) {
    %c0_i32 = arith.constant 0 : i32
    %c0_i32_0 = arith.constant 0 : i32
    %c0_i32_1 = arith.constant 0 : i32
    return %c0_i32, %c0_i32_0 : i32, i32
  }
  func.func @transform_4(%arg0: i32) -> (i32, i32) {
    %c0_i32 = arith.constant 0 : i32
    %c0_i32_0 = arith.constant 0 : i32
    %c0_i32_1 = arith.constant 0 : i32
    return %c0_i32, %c0_i32_0 : i32, i32
  }
  func.func @transform_5(%arg0: i32) -> (i32, i32) {
    %c0_i32 = arith.constant 0 : i32
    %c0_i32_0 = arith.constant 0 : i32
    %c0_i32_1 = arith.constant 0 : i32
    return %c0_i32, %c0_i32_0 : i32, i32
  }
  func.func @transform_6(%arg0: i32) -> (i32, i32) {
    %c0_i32 = arith.constant 0 : i32
    %c0_i32_0 = arith.constant 0 : i32
    %c0_i32_1 = arith.constant 0 : i32
    return %c0_i32, %c0_i32_0 : i32, i32
  }
  func.func @transform_7(%arg0: i32) -> (i32, i32) {
    %c0_i32 = arith.constant 0 : i32
    %c0_i32_0 = arith.constant 0 : i32
    %c0_i32_1 = arith.constant 0 : i32
    return %c0_i32, %c0_i32_0 : i32, i32
  }
  func.func @transform_8(%arg0: i32) -> (i32, i32) {
    %c0_i32 = arith.constant 0 : i32
    %c0_i32_0 = arith.constant 0 : i32
    %c0_i32_1 = arith.constant 0 : i32
    return %c0_i32, %c0_i32_0 : i32, i32
  }
  func.func @transform_9(%arg0: i32) -> (i32, i32) {
    %c0_i32 = arith.constant 0 : i32
    %c0_i32_0 = arith.constant 0 : i32
    return %arg0, %c0_i32 : i32, i32
  }
}

</mosaic_0001>

<llo_original>
// kernel: tpu_custom_call.1
$region0: #{tpu_custom_call.1}
  #allocation0 [shape = 'u32[]', space=smem, size = 0x4, offset = 0x4, fixed_abs, tag = 'smem constant byte address 0x4 - core index']
  #allocation1 [shape = 'u32[144,128]{1,0:T(1,128)}', space=vmem, size = 0x12000, scoped, tag = 'internal scratch']
  %s0 = inlined_call_operand.hbm [shape: bf16[16,32], index: 0, kind: input, shape index: {}]
  %s1 = inlined_call_operand.hbm [shape: bf16[32,128], index: 1, kind: input, shape index: {}]
  %s2 = inlined_call_operand.vmem [shape: f32[1,128], index: 2, kind: input, shape index: {}]
  %s3 = inlined_call_operand.hbm [shape: bf16[128,128], index: 3, kind: input, shape index: {}]
  %s4 = inlined_call_operand.vmem [shape: f32[1,128], index: 4, kind: input, shape index: {}]
  %s5 = inlined_call_operand.hbm [shape: bf16[128,128], index: 5, kind: input, shape index: {}]
  %s6 = inlined_call_operand.vmem [shape: f32[1,128], index: 6, kind: input, shape index: {}]
  %s7 = inlined_call_operand.hbm [shape: bf16[128,128], index: 7, kind: input, shape index: {}]
  %s8 = inlined_call_operand.vmem [shape: f32[1,128], index: 8, kind: input, shape index: {}]
  %s9 = inlined_call_operand.hbm [shape: f32[16,128], index: 9, kind: output, shape index: {}]
  %s10 = sld [smem:[#allocation0]]
  $region66: #{tpu_custom_call.1} parent=0
    _
  %s12 = ssub.s32 1, %s10
  %s13 = scalar_select 0, %s12, %s10
  $region1: #{tpu_custom_call.1} parent=0
    #allocation2 [shape = 'u8[4096]{0}', space=vmem, size = 0x1000, scoped, tag = 'input window, operand 0, single buffered']
    #allocation3 [shape = 's32[1]{0}', space=sflag, size = 0x4, scoped, tag = 'scoped memory for tpu_custom_call.1']
    #allocation4 [shape = 's32[1]{0}', space=sflag, size = 0x4, scoped, tag = 'scoped memory for tpu_custom_call.1']
    #allocation5 [shape = 'u8[8192]{0}', space=vmem, size = 0x2000, scoped, tag = 'input window, operand 1, single buffered']
    #allocation6 [shape = 's32[1]{0}', space=sflag, size = 0x4, scoped, tag = 'scoped memory for tpu_custom_call.1']
    #allocation7 [shape = 'u8[32768]{0}', space=vmem, size = 0x8000, scoped, tag = 'input window, operand 3, single buffered']
    #allocation8 [shape = 'u8[32768]{0}', space=vmem, size = 0x8000, scoped, tag = 'input window, operand 5, single buffered']
    #allocation9 [shape = 's32[1]{0}', space=sflag, size = 0x4, scoped, tag = 'scoped memory for tpu_custom_call.1']
    #allocation10 [shape = 'u8[32768]{0}', space=vmem, size = 0x8000, scoped, tag = 'input window, operand 7, single buffered']
    #allocation11 [shape = 'u8[8192]{0}', space=vmem, size = 0x2000, scoped, tag = 'output window, operand 0, single buffered']
    %14 = vsyncpa [#allocation3], 0
    %15 = vsyncpa [#allocation6], 0
    %16 = vsyncpa [#allocation9], 0
    %17 = vsyncpa [#allocation4], 0
    // Predicated region
    $region2: #{tpu_custom_call.1} parent=1 // pred_check
      _
    $region3: #{tpu_custom_call.1} parent=1 // pred_check_branch
      %19 = sbr.rel (0) target = $region5
    $region4: #{tpu_custom_call.1} parent=1 // pred_region
      %s21 = ssub.s32 128, 128
      %22 = vsyncadd [#allocation3], %s21
      %s23 = sshll.u32 [#allocation2], 4
      %s24 = int_to_ptr.vmem [resolvable:$true] %s23
      %29 = dma.hbm_to_vmem [thread:$0]  %s0, 128, %s24, [#allocation3], 64, 64, 4
    $region5: #{tpu_custom_call.1} parent=1 // pred_fallthru
      _
    // Predicated region
    $region6: #{tpu_custom_call.1} parent=1 // pred_check
      _
    $region7: #{tpu_custom_call.1} parent=1 // pred_check_branch
      %31 = sbr.rel (0) target = $region9
    $region8: #{tpu_custom_call.1} parent=1 // pred_region
      %s33 = ssub.s32 256, 256
      %34 = vsyncadd [#allocation6], %s33
      %s35 = sshll.u32 [#allocation5], 4
      %s36 = int_to_ptr.vmem [resolvable:$true] %s35
      %41 = dma.hbm_to_vmem [thread:$0]  %s1, 256, %s36, [#allocation6], 64, 64, 4
    $region9: #{tpu_custom_call.1} parent=1 // pred_fallthru
      _
    // Predicated region
    $region10: #{tpu_custom_call.1} parent=1 // pred_check
      _
    $region11: #{tpu_custom_call.1} parent=1 // pred_check_branch
      %43 = sbr.rel (0) target = $region13
    $region12: #{tpu_custom_call.1} parent=1 // pred_region
      _
    $region13: #{tpu_custom_call.1} parent=1 // pred_fallthru
      _
    // Predicated region
    $region14: #{tpu_custom_call.1} parent=1 // pred_check
      _
    $region15: #{tpu_custom_call.1} parent=1 // pred_check_branch
      %45 = sbr.rel (0) target = $region17
    $region16: #{tpu_custom_call.1} parent=1 // pred_region
      %s47 = ssub.s32 1024, 1024
      %48 = vsyncadd [#allocation6], %s47
      %s49 = sshll.u32 [#allocation7], 4
      %s50 = int_to_ptr.vmem [resolvable:$true] %s49
      %55 = dma.hbm_to_vmem [thread:$0]  %s3, 1024, %s50, [#allocation6], 64, 64, 4
    $region17: #{tpu_custom_call.1} parent=1 // pred_fallthru
      _
    // Predicated region
    $region18: #{tpu_custom_call.1} parent=1 // pred_check
      _
    $region19: #{tpu_custom_call.1} parent=1 // pred_check_branch
      %57 = sbr.rel (0) target = $region21
    $region20: #{tpu_custom_call.1} parent=1 // pred_region
      _
    $region21: #{tpu_custom_call.1} parent=1 // pred_fallthru
      _
    // Predicated region
    $region22: #{tpu_custom_call.1} parent=1 // pred_check
      _
    $region23: #{tpu_custom_call.1} parent=1 // pred_check_branch
      %59 = sbr.rel (0) target = $region25
    $region24: #{tpu_custom_call.1} parent=1 // pred_region
      %s61 = ssub.s32 1024, 1024
      %62 = vsyncadd [#allocation9], %s61
      %s63 = sshll.u32 [#allocation8], 4
      %s64 = int_to_ptr.vmem [resolvable:$true] %s63
      %69 = dma.hbm_to_vmem [thread:$0]  %s5, 1024, %s64, [#allocation9], 64, 64, 4
    $region25: #{tpu_custom_call.1} parent=1 // pred_fallthru
      _
    // Predicated region
    $region26: #{tpu_custom_call.1} parent=1 // pred_check
      _
    $region27: #{tpu_custom_call.1} parent=1 // pred_check_branch
      %71 = sbr.rel (0) target = $region29
    $region28: #{tpu_custom_call.1} parent=1 // pred_region
      _
    $region29: #{tpu_custom_call.1} parent=1 // pred_fallthru
      _
    // Predicated region
    $region30: #{tpu_custom_call.1} parent=1 // pred_check
      _
    $region31: #{tpu_custom_call.1} parent=1 // pred_check_branch
      %73 = sbr.rel (0) target = $region33
    $region32: #{tpu_custom_call.1} parent=1 // pred_region
      %s75 = ssub.s32 1024, 1024
      %76 = vsyncadd [#allocation9], %s75
      %s77 = sshll.u32 [#allocation10], 4
      %s78 = int_to_ptr.vmem [resolvable:$true] %s77
      %83 = dma.hbm_to_vmem [thread:$0]  %s7, 1024, %s78, [#allocation9], 64, 64, 4
    $region33: #{tpu_custom_call.1} parent=1 // pred_fallthru
      _
    // Predicated region
    $region34: #{tpu_custom_call.1} parent=1 // pred_check
      _
    $region35: #{tpu_custom_call.1} parent=1 // pred_check_branch
      %85 = sbr.rel (0) target = $region37
    $region36: #{tpu_custom_call.1} parent=1 // pred_region
      _
    $region37: #{tpu_custom_call.1} parent=1 // pred_fallthru
      _
    // Predicated region
    $region38: #{tpu_custom_call.1} parent=1 // pred_check
      _
    $region39: #{tpu_custom_call.1} parent=1 // pred_check_branch
      %87 = sbr.rel (0) target = $region41
    $region40: #{tpu_custom_call.1} parent=1 // pred_region
      %88 = dma.done [#allocation3], 128
    $region41: #{tpu_custom_call.1} parent=1 // pred_fallthru
      _
    // Predicated region
    $region42: #{tpu_custom_call.1} parent=1 // pred_check
      _
    $region43: #{tpu_custom_call.1} parent=1 // pred_check_branch
      %90 = sbr.rel (0) target = $region45
    $region44: #{tpu_custom_call.1} parent=1 // pred_region
      %91 = dma.done [#allocation6], 256
    $region45: #{tpu_custom_call.1} parent=1 // pred_fallthru
      _
    // Predicated region
    $region46: #{tpu_custom_call.1} parent=1 // pred_check
      _
    $region47: #{tpu_custom_call.1} parent=1 // pred_check_branch
      %93 = sbr.rel (0) target = $region49
    $region48: #{tpu_custom_call.1} parent=1 // pred_region
      %94 = dma.done [#allocation6], 1024
    $region49: #{tpu_custom_call.1} parent=1 // pred_fallthru
      _
    // Predicated region
    $region50: #{tpu_custom_call.1} parent=1 // pred_check
      _
    $region51: #{tpu_custom_call.1} parent=1 // pred_check_branch
      %96 = sbr.rel (0) target = $region53
    $region52: #{tpu_custom_call.1} parent=1 // pred_region
      %97 = dma.done [#allocation9], 1024
    $region53: #{tpu_custom_call.1} parent=1 // pred_fallthru
      _
    // Predicated region
    $region54: #{tpu_custom_call.1} parent=1 // pred_check
      _
    $region55: #{tpu_custom_call.1} parent=1 // pred_check_branch
      %99 = sbr.rel (0) target = $region57
    $region56: #{tpu_custom_call.1} parent=1 // pred_region
      %100 = dma.done [#allocation9], 1024
    $region57: #{tpu_custom_call.1} parent=1 // pred_fallthru
      _
    %v102 = vld [vmem:[#allocation2] sm:$0xf]
    %v103 = vld [vmem:[#allocation2 + $0x4] sm:$0xf]
    %v104 = vld [vmem:[#allocation5] sm:$0xf]
    %v105 = vld [vmem:[#allocation5 + $0x4] sm:$0xf]
    %v106 = vld [vmem:[#allocation5 + $0x8] sm:$0xf]
    %v107 = vld [vmem:[#allocation5 + $0xc] sm:$0xf]
    %v108 = vld [vmem:[%s2] sm:$0x1]
    %v110 = vlaneseq
    %v111 = vshrl.u32 %v110, 7
    %v112 = vsub.s32 0, %v111
    %v113 = vrot.slane %v108, %v112
    %v117 = vunpack.c.l.b16 %v102
    %v118 = vunpack.c.l.b16 %v103
    %v119 = vpack.c.b16 %v118, %v117
    %v124 = vunpack.c.l.b16 %v104
    %v125 = vunpack.c.l.b16 %v105
    %v126 = vunpack.c.l.b16 %v106
    %v127 = vunpack.c.l.b16 %v107
    %v128 = vpack.c.b16 %v125, %v124
    %v129 = vpack.c.b16 %v127, %v126
    %vm132 = vcmask 261120
    %v134 = vsel %vm132, %v119, 0
    %136 = vmatprep.subr.bf16.mxu0 0
    %137 = vmatpush1.bf16.msra.mxu0 0
    %138 = vmatprep.subr.bf16.mxu0 0
    %139 = vmatpush1.bf16.msra.mxu0 0
    %140 = vmatprep.subr.bf16.mxu0 0
    %141 = vmatpush1.bf16.msra.mxu0 0
    %142 = vmatprep.subr.bf16.mxu0 0
    %143 = vmatpush1.bf16.msra.mxu0 0
    %144 = vmatprep.subr.bf16.mxu0 0
    %145 = vmatpush1.bf16.msra.mxu0 0
    %146 = vmatprep.subr.bf16.mxu0 0
    %147 = vmatpush1.bf16.msra.mxu0 0
    %148 = vmatprep.subr.bf16.mxu0 0
    %149 = vmatpush1.bf16.msra.mxu0 %v129
    %150 = vmatprep.subr.bf16.mxu0 0
    %151 = vmatpush1.bf16.msra.mxu0 %v128
    %152 = vmatprep.subr.bf16.mxu0 0
    %153 = vmatpush2.bf16.msra.mxu0 0
    %154 = vmatprep.subr.bf16.mxu0 0
    %155 = vmatpush2.bf16.msra.mxu0 0
    %156 = vmatprep.subr.bf16.mxu0 0
    %157 = vmatpush2.bf16.msra.mxu0 0
    %158 = vmatprep.subr.bf16.mxu0 0
    %159 = vmatpush2.bf16.msra.mxu0 0
    %160 = vmatprep.subr.bf16.mxu0 0
    %161 = vmatpush2.bf16.msra.mxu0 0
    %162 = vmatprep.subr.bf16.mxu0 0
    %163 = vmatpush2.bf16.msra.mxu0 0
    %164 = vmatprep.subr.bf16.mxu0 0
    %165 = vmatpush2.bf16.msra.mxu0 0
    %166 = vmatprep.subr.bf16.mxu0 0
    %167 = vmatpush2.bf16.msra.mxu0 0
    %168 = vmatprep.mubr.bf16.mxu0 0
    %169 = vmatmul.mubr.bf16.gmra.mxu0 %v134
    %v170 = vpop.f32.mrf.mxu0
    %v171 = vadd.f32 %v113, %v170
    %v172 = vpop.f32.mrf.mxu0
    %v173 = vpop.f32.mrf.mxu0
    %v174 = vadd.f32 %v113, %v173
    %v175 = vpop.f32.mrf.mxu0
    %176 = vdwg.mxu0
    %v177 = vmax.f32 %v171, 0.0
    %v178 = vmax.f32 %v174, 0.0
    %v179 = vpack.c.bf16 %v178, %v177
    %v180 = vld [vmem:[#allocation7] sm:$0xf]
    %v181 = vld [vmem:[#allocation7 + $0x4] sm:$0xf]
    %v182 = vld [vmem:[#allocation7 + $0x8] sm:$0xf]
    %v183 = vld [vmem:[#allocation7 + $0xc] sm:$0xf]
    %v184 = vld [vmem:[#allocation7 + $0x10] sm:$0xf]
    %v185 = vld [vmem:[#allocation7 + $0x14] sm:$0xf]
    %v186 = vld [vmem:[#allocation7 + $0x18] sm:$0xf]
    %v187 = vld [vmem:[#allocation7 + $0x1c] sm:$0xf]
    %v188 = vld [vmem:[#allocation7 + $0x20] sm:$0xf]
    %v189 = vld [vmem:[#allocation7 + $0x24] sm:$0xf]
    %v190 = vld [vmem:[#allocation7 + $0x28] sm:$0xf]
    %v191 = vld [vmem:[#allocation7 + $0x2c] sm:$0xf]
    %v192 = vld [vmem:[#allocation7 + $0x30] sm:$0xf]
    %v193 = vld [vmem:[#allocation7 + $0x34] sm:$0xf]
    %v194 = vld [vmem:[#allocation7 + $0x38] sm:$0xf]
    %v195 = vld [vmem:[#allocation7 + $0x3c] sm:$0xf]
    %v196 = vld [vmem:[%s4] sm:$0x1]
    %v198 = vlaneseq
    %v199 = vshrl.u32 %v198, 7
    %v200 = vsub.s32 0, %v199
    %v201 = vrot.slane %v196, %v200
    %v219 = vunpack.c.l.b16 %v180
    %v220 = vunpack.c.l.b16 %v181
    %v221 = vunpack.c.l.b16 %v182
    %v222 = vunpack.c.l.b16 %v183
    %v223 = vunpack.c.l.b16 %v184
    %v224 = vunpack.c.l.b16 %v185
    %v225 = vunpack.c.l.b16 %v186
    %v226 = vunpack.c.l.b16 %v187
    %v227 = vunpack.c.l.b16 %v188
    %v228 = vunpack.c.l.b16 %v189
    %v229 = vunpack.c.l.b16 %v190
    %v230 = vunpack.c.l.b16 %v191
    %v231 = vunpack.c.l.b16 %v192
    %v232 = vunpack.c.l.b16 %v193
    %v233 = vunpack.c.l.b16 %v194
    %v234 = vunpack.c.l.b16 %v195
    %v235 = vpack.c.b16 %v220, %v219
    %v236 = vpack.c.b16 %v222, %v221
    %v237 = vpack.c.b16 %v224, %v223
    %v238 = vpack.c.b16 %v226, %v225
    %v239 = vpack.c.b16 %v228, %v227
    %v240 = vpack.c.b16 %v230, %v229
    %v241 = vpack.c.b16 %v232, %v231
    %v242 = vpack.c.b16 %v234, %v233
    %251 = vmatprep.subr.bf16.mxu0 0
    %252 = vmatpush1.bf16.msra.mxu0 %v242
    %253 = vmatprep.subr.bf16.mxu0 0
    %254 = vmatpush1.bf16.msra.mxu0 %v241
    %255 = vmatprep.subr.bf16.mxu0 0
    %256 = vmatpush1.bf16.msra.mxu0 %v240
    %257 = vmatprep.subr.bf16.mxu0 0
    %258 = vmatpush1.bf16.msra.mxu0 %v239
    %259 = vmatprep.subr.bf16.mxu0 0
    %260 = vmatpush1.bf16.msra.mxu0 %v238
    %261 = vmatprep.subr.bf16.mxu0 0
    %262 = vmatpush1.bf16.msra.mxu0 %v237
    %263 = vmatprep.subr.bf16.mxu0 0
    %264 = vmatpush1.bf16.msra.mxu0 %v236
    %265 = vmatprep.subr.bf16.mxu0 0
    %266 = vmatpush1.bf16.msra.mxu0 %v235
    %267 = vmatprep.subr.bf16.mxu0 0
    %268 = vmatpush2.bf16.msra.mxu0 0
    %269 = vmatprep.subr.bf16.mxu0 0
    %270 = vmatpush2.bf16.msra.mxu0 0
    %271 = vmatprep.subr.bf16.mxu0 0
    %272 = vmatpush2.bf16.msra.mxu0 0
    %273 = vmatprep.subr.bf16.mxu0 0
    %274 = vmatpush2.bf16.msra.mxu0 0
    %275 = vmatprep.subr.bf16.mxu0 0
    %276 = vmatpush2.bf16.msra.mxu0 0
    %277 = vmatprep.subr.bf16.mxu0 0
    %278 = vmatpush2.bf16.msra.mxu0 0
    %279 = vmatprep.subr.bf16.mxu0 0
    %280 = vmatpush2.bf16.msra.mxu0 0
    %281 = vmatprep.subr.bf16.mxu0 0
    %282 = vmatpush2.bf16.msra.mxu0 0
    %283 = vmatprep.mubr.bf16.mxu0 0
    %284 = vmatmul.mubr.bf16.gmra.mxu0 %v179
    %v285 = vpop.f32.mrf.mxu0
    %v286 = vadd.f32 %v201, %v285
    %v287 = vpop.f32.mrf.mxu0
    %v288 = vpop.f32.mrf.mxu0
    %v289 = vadd.f32 %v201, %v288
    %v290 = vpop.f32.mrf.mxu0
    %291 = vdwg.mxu0
    %v292 = vmax.f32 %v286, 0.0
    %v293 = vmax.f32 %v289, 0.0
    %v294 = vpack.c.bf16 %v293, %v292
    %v295 = vld [vmem:[#allocation8] sm:$0xf]
    %v296 = vld [vmem:[#allocation8 + $0x4] sm:$0xf]
    %v297 = vld [vmem:[#allocation8 + $0x8] sm:$0xf]
    %v298 = vld [vmem:[#allocation8 + $0xc] sm:$0xf]
    %v299 = vld [vmem:[#allocation8 + $0x10] sm:$0xf]
    %v300 = vld [vmem:[#allocation8 + $0x14] sm:$0xf]
    %v301 = vld [vmem:[#allocation8 + $0x18] sm:$0xf]
    %v302 = vld [vmem:[#allocation8 + $0x1c] sm:$0xf]
    %v303 = vld [vmem:[#allocation8 + $0x20] sm:$0xf]
    %v304 = vld [vmem:[#allocation8 + $0x24] sm:$0xf]
    %v305 = vld [vmem:[#allocation8 + $0x28] sm:$0xf]
    %v306 = vld [vmem:[#allocation8 + $0x2c] sm:$0xf]
    %v307 = vld [vmem:[#allocation8 + $0x30] sm:$0xf]
    %v308 = vld [vmem:[#allocation8 + $0x34] sm:$0xf]
    %v309 = vld [vmem:[#allocation8 + $0x38] sm:$0xf]
    %v310 = vld [vmem:[#allocation8 + $0x3c] sm:$0xf]
    %v311 = vld [vmem:[%s6] sm:$0x1]
    %v313 = vlaneseq
    %v314 = vshrl.u32 %v313, 7
    %v315 = vsub.s32 0, %v314
    %v316 = vrot.slane %v311, %v315
    %v334 = vunpack.c.l.b16 %v295
    %v335 = vunpack.c.l.b16 %v296
    %v336 = vunpack.c.l.b16 %v297
    %v337 = vunpack.c.l.b16 %v298
    %v338 = vunpack.c.l.b16 %v299
    %v339 = vunpack.c.l.b16 %v300
    %v340 = vunpack.c.l.b16 %v301
    %v341 = vunpack.c.l.b16 %v302
    %v342 = vunpack.c.l.b16 %v303
    %v343 = vunpack.c.l.b16 %v304
    %v344 = vunpack.c.l.b16 %v305
    %v345 = vunpack.c.l.b16 %v306
    %v346 = vunpack.c.l.b16 %v307
    %v347 = vunpack.c.l.b16 %v308
    %v348 = vunpack.c.l.b16 %v309
    %v349 = vunpack.c.l.b16 %v310
    %v350 = vpack.c.b16 %v335, %v334
    %v351 = vpack.c.b16 %v337, %v336
    %v352 = vpack.c.b16 %v339, %v338
    %v353 = vpack.c.b16 %v341, %v340
    %v354 = vpack.c.b16 %v343, %v342
    %v355 = vpack.c.b16 %v345, %v344
    %v356 = vpack.c.b16 %v347, %v346
    %v357 = vpack.c.b16 %v349, %v348
    %366 = vmatprep.subr.bf16.mxu0 0
    %367 = vmatpush1.bf16.msra.mxu0 %v357
    %368 = vmatprep.subr.bf16.mxu0 0
    %369 = vmatpush1.bf16.msra.mxu0 %v356
    %370 = vmatprep.subr.bf16.mxu0 0
    %371 = vmatpush1.bf16.msra.mxu0 %v355
    %372 = vmatprep.subr.bf16.mxu0 0
    %373 = vmatpush1.bf16.msra.mxu0 %v354
    %374 = vmatprep.subr.bf16.mxu0 0
    %375 = vmatpush1.bf16.msra.mxu0 %v353
    %376 = vmatprep.subr.bf16.mxu0 0
    %377 = vmatpush1.bf16.msra.mxu0 %v352
    %378 = vmatprep.subr.bf16.mxu0 0
    %379 = vmatpush1.bf16.msra.mxu0 %v351
    %380 = vmatprep.subr.bf16.mxu0 0
    %381 = vmatpush1.bf16.msra.mxu0 %v350
    %382 = vmatprep.subr.bf16.mxu0 0
    %383 = vmatpush2.bf16.msra.mxu0 0
    %384 = vmatprep.subr.bf16.mxu0 0
    %385 = vmatpush2.bf16.msra.mxu0 0
    %386 = vmatprep.subr.bf16.mxu0 0
    %387 = vmatpush2.bf16.msra.mxu0 0
    %388 = vmatprep.subr.bf16.mxu0 0
    %389 = vmatpush2.bf16.msra.mxu0 0
    %390 = vmatprep.subr.bf16.mxu0 0
    %391 = vmatpush2.bf16.msra.mxu0 0
    %392 = vmatprep.subr.bf16.mxu0 0
    %393 = vmatpush2.bf16.msra.mxu0 0
    %394 = vmatprep.subr.bf16.mxu0 0
    %395 = vmatpush2.bf16.msra.mxu0 0
    %396 = vmatprep.subr.bf16.mxu0 0
    %397 = vmatpush2.bf16.msra.mxu0 0
    %398 = vmatprep.mubr.bf16.mxu0 0
    %399 = vmatmul.mubr.bf16.gmra.mxu0 %v294
    %v400 = vpop.f32.mrf.mxu0
    %v401 = vadd.f32 %v316, %v400
    %v402 = vpop.f32.mrf.mxu0
    %v403 = vpop.f32.mrf.mxu0
    %v404 = vadd.f32 %v316, %v403
    %v405 = vpop.f32.mrf.mxu0
    %406 = vdwg.mxu0
    %v407 = vmax.f32 %v401, 0.0
    %v408 = vmax.f32 %v404, 0.0
    %v409 = vpack.c.bf16 %v408, %v407
    %v410 = vld [vmem:[#allocation10] sm:$0xf]
    %v411 = vld [vmem:[#allocation10 + $0x4] sm:$0xf]
    %v412 = vld [vmem:[#allocation10 + $0x8] sm:$0xf]
    %v413 = vld [vmem:[#allocation10 + $0xc] sm:$0xf]
    %v414 = vld [vmem:[#allocation10 + $0x10] sm:$0xf]
    %v415 = vld [vmem:[#allocation10 + $0x14] sm:$0xf]
    %v416 = vld [vmem:[#allocation10 + $0x18] sm:$0xf]
    %v417 = vld [vmem:[#allocation10 + $0x1c] sm:$0xf]
    %v418 = vld [vmem:[#allocation10 + $0x20] sm:$0xf]
    %v419 = vld [vmem:[#allocation10 + $0x24] sm:$0xf]
    %v420 = vld [vmem:[#allocation10 + $0x28] sm:$0xf]
    %v421 = vld [vmem:[#allocation10 + $0x2c] sm:$0xf]
    %v422 = vld [vmem:[#allocation10 + $0x30] sm:$0xf]
    %v423 = vld [vmem:[#allocation10 + $0x34] sm:$0xf]
    %v424 = vld [vmem:[#allocation10 + $0x38] sm:$0xf]
    %v425 = vld [vmem:[#allocation10 + $0x3c] sm:$0xf]
    %v426 = vld [vmem:[%s8] sm:$0x1]
    %v428 = vlaneseq
    %v429 = vshrl.u32 %v428, 7
    %v430 = vsub.s32 0, %v429
    %v431 = vrot.slane %v426, %v430
    %v449 = vunpack.c.l.b16 %v410
    %v450 = vunpack.c.l.b16 %v411
    %v451 = vunpack.c.l.b16 %v412
    %v452 = vunpack.c.l.b16 %v413
    %v453 = vunpack.c.l.b16 %v414
    %v454 = vunpack.c.l.b16 %v415
    %v455 = vunpack.c.l.b16 %v416
    %v456 = vunpack.c.l.b16 %v417
    %v457 = vunpack.c.l.b16 %v418
    %v458 = vunpack.c.l.b16 %v419
    %v459 = vunpack.c.l.b16 %v420
    %v460 = vunpack.c.l.b16 %v421
    %v461 = vunpack.c.l.b16 %v422
    %v462 = vunpack.c.l.b16 %v423
    %v463 = vunpack.c.l.b16 %v424
    %v464 = vunpack.c.l.b16 %v425
    %v465 = vpack.c.b16 %v450, %v449
    %v466 = vpack.c.b16 %v452, %v451
    %v467 = vpack.c.b16 %v454, %v453
    %v468 = vpack.c.b16 %v456, %v455
    %v469 = vpack.c.b16 %v458, %v457
    %v470 = vpack.c.b16 %v460, %v459
    %v471 = vpack.c.b16 %v462, %v461
    %v472 = vpack.c.b16 %v464, %v463
    %481 = vmatprep.subr.bf16.mxu0 0
    %482 = vmatpush1.bf16.msra.mxu0 %v472
    %483 = vmatprep.subr.bf16.mxu0 0
    %484 = vmatpush1.bf16.msra.mxu0 %v471
    %485 = vmatprep.subr.bf16.mxu0 0
    %486 = vmatpush1.bf16.msra.mxu0 %v470
    %487 = vmatprep.subr.bf16.mxu0 0
    %488 = vmatpush1.bf16.msra.mxu0 %v469
    %489 = vmatprep.subr.bf16.mxu0 0
    %490 = vmatpush1.bf16.msra.mxu0 %v468
    %491 = vmatprep.subr.bf16.mxu0 0
    %492 = vmatpush1.bf16.msra.mxu0 %v467
    %493 = vmatprep.subr.bf16.mxu0 0
    %494 = vmatpush1.bf16.msra.mxu0 %v466
    %495 = vmatprep.subr.bf16.mxu0 0
    %496 = vmatpush1.bf16.msra.mxu0 %v465
    %497 = vmatprep.subr.bf16.mxu0 0
    %498 = vmatpush2.bf16.msra.mxu0 0
    %499 = vmatprep.subr.bf16.mxu0 0
    %500 = vmatpush2.bf16.msra.mxu0 0
    %501 = vmatprep.subr.bf16.mxu0 0
    %502 = vmatpush2.bf16.msra.mxu0 0
    %503 = vmatprep.subr.bf16.mxu0 0
    %504 = vmatpush2.bf16.msra.mxu0 0
    %505 = vmatprep.subr.bf16.mxu0 0
    %506 = vmatpush2.bf16.msra.mxu0 0
    %507 = vmatprep.subr.bf16.mxu0 0
    %508 = vmatpush2.bf16.msra.mxu0 0
    %509 = vmatprep.subr.bf16.mxu0 0
    %510 = vmatpush2.bf16.msra.mxu0 0
    %511 = vmatprep.subr.bf16.mxu0 0
    %512 = vmatpush2.bf16.msra.mxu0 0
    %513 = vmatprep.mubr.bf16.mxu0 0
    %514 = vmatmul.mubr.bf16.gmra.mxu0 %v409
    %v515 = vpop.f32.mrf.mxu0
    %v516 = vadd.f32 %v431, %v515
    %v517 = vpop.f32.mrf.mxu0
    %v518 = vpop.f32.mrf.mxu0
    %v519 = vadd.f32 %v431, %v518
    %v520 = vpop.f32.mrf.mxu0
    %521 = vdwg.mxu0
    %522 = vst [vmem:[#allocation11] sm:$0xff] %v516
    %523 = vst [vmem:[#allocation11 + $0x8] sm:$0xff] %v519
    // Predicated region
    $region58: #{tpu_custom_call.1} parent=1 // pred_check
      _
    $region59: #{tpu_custom_call.1} parent=1 // pred_check_branch
      %525 = sbr.rel (0) target = $region61
    $region60: #{tpu_custom_call.1} parent=1 // pred_region
      %s527 = ssub.s32 256, 256
      %528 = vsyncadd [#allocation4], %s527
      %s529 = sshll.u32 [#allocation11], 4
      %s530 = int_to_ptr.vmem [resolvable:$true] %s529
      %535 = dma.vmem_to_hbm [thread:$0]  %s530, 256, %s9, [#allocation4], 128, 128, 8
    $region61: #{tpu_custom_call.1} parent=1 // pred_fallthru
      _
    // Predicated region
    $region62: #{tpu_custom_call.1} parent=1 // pred_check
      _
    $region63: #{tpu_custom_call.1} parent=1 // pred_check_branch
      %537 = sbr.rel (0) target = $region65
    $region64: #{tpu_custom_call.1} parent=1 // pred_region
      %538 = dma.done [#allocation4], 256
    $region65: #{tpu_custom_call.1} parent=1 // pred_fallthru
      _
    %539 = vsyncpa [#allocation3], 1
    %540 = vsyncpa [#allocation6], 1
    %541 = vsyncpa [#allocation9], 1
    %542 = vsyncpa [#allocation4], 1

</llo_original>
